<compile_context>
chip_gen: v5e
topology: v5e:2x2
jax: 0.10.0
libtpu: 0.0.40
codegen_flags: <defaults>
</compile_context>

<pallas_src>
import math

import jax
import jax.numpy as jnp
from jax.experimental import pallas as pl
from jax.experimental.pallas import tpu as pltpu


def make_positional_encoding(d_model: int, max_len: int = 5000) -> jnp.ndarray:
    """Deterministic buffer construction, identical to the PyTorch __init__ (plain JAX glue)."""
    position = jnp.arange(0, max_len, dtype=jnp.float32)[:, None]            # (max_len, 1)
    div_term = jnp.exp(
        jnp.arange(0, d_model, 2, dtype=jnp.float32) * (-math.log(10000.0) / d_model)
    )                                                                         # (d_model/2,)
    angles = position * div_term                                              # (max_len, d_model/2)
    pe = jnp.zeros((max_len, d_model), dtype=jnp.float32)
    pe = pe.at[:, 0::2].set(jnp.sin(angles))
    pe = pe.at[:, 1::2].set(jnp.cos(angles))
    return pe                                                                 # (max_len, d_model)


def _pe_add_kernel(x_ref, pe_ref, o_ref):
    # x_ref / o_ref: (TB, K, TN) tile; pe_ref: (K, TN) tile (kept in f32).
    # Compute in the promoted (output) dtype -> matches PyTorch type promotion.
    acc = o_ref.dtype
    o_ref[...] = x_ref[...].astype(acc) + pe_ref[...][None, :, :].astype(acc)


def _sublane_quantum(dtype) -> int:
    # Sublane packing quantum: 8 rows for 32-bit, 16 for 16-bit, 32 for 8-bit.
    return max(8, 32 // jnp.dtype(dtype).itemsize)


def _round_up(v: int, m: int) -> int:
    return ((v + m - 1) // m) * m


def _tpu_mem_plan():
    """Returns (vmem_limit_bytes_or_None, block_vmem_budget_bytes, target_x_block_bytes),
    tuned per TPU generation."""
    try:
        cap = int(pltpu.get_tpu_info().vmem_capacity_bytes)
    except Exception:
        # Unknown generation: stay under the smallest default scoped-VMEM limit (16 MiB, v5e).
        return None, 10 << 20, 1 << 20
    if cap <= (64 << 20):
        # v7x-class: 64 MiB physical VMEM. Bigger blocks to amortize ~0.35us/step at 3.2 TB/s.
        return 48 << 20, 36 << 20, 6 << 20
    # v5e / v6e: 128 MiB physical. Raise the scoped limit explicitly (v5e default is 16 MiB).
    return 64 << 20, 32 << 20, 2 << 20


def _plan_layout(B: int, N: int, x_dtype, out_dtype):
    """View x as (B, K, C) with C = N_pad // K.  K is every block's sublane dim: make it
    >= the sublane quantum when N allows, while keeping C >= 1024 lanes (>=4 KiB
    contiguous per DMA'd row) when possible.  Also pick the batch tile TB."""
    N_pad = _round_up(N, 128)
    lane_units = N_pad // 128
    sub = max(_sublane_quantum(x_dtype), _sublane_quantum(out_dtype))

    max_k = min(lane_units, 4 * sub)
    divs = [d for d in range(1, max_k + 1) if lane_units % d == 0]
    dense = [d for d in divs if d >= sub]
    dense_contig = [d for d in dense if (N_pad // d) >= 1024]
    if dense_contig:
        K = dense_contig[0]          # sublane-dense AND >= 4 KiB contiguous rows
    elif dense:
        K = dense[0]                 # sublane-dense
    else:
        K = divs[-1]                 # best effort (tiny N)
    C = N_pad // K

    if B <= 256:
        TB = B
    else:
        TB = max(d for d in range(1, 257) if B % d == 0)  # largest divisor of B <= 256
    return N_pad, K, C, TB


def _choose_lane_tile(C, TB, K, x_dtype, out_dtype, pe_dtype,
                      block_vmem_budget, target_x_block_bytes):
    """Largest 128-multiple lane tile that (a) divides C, (b) keeps one x block near the
    per-generation target, and (c) keeps the total double-buffered VMEM footprint
    (2x x + 2x out + 2x pe, WITH sublane padding) inside the budget."""
    def pad_rows(rows, dt):
        q = _sublane_quantum(dt)
        return _round_up(rows, q)

    x_it = jnp.dtype(x_dtype).itemsize
    o_it = jnp.dtype(out_dtype).itemsize
    p_it = jnp.dtype(pe_dtype).itemsize

    # VMEM bytes per 128 lanes of tile width, summed over all double-buffered blocks.
    per_unit_all = 128 * (
        2 * TB * pad_rows(K, x_dtype) * x_it
        + 2 * TB * pad_rows(K, out_dtype) * o_it
        + 2 * pad_rows(K, pe_dtype) * p_it
    )
    per_unit_x = 128 * TB * pad_rows(K, x_dtype) * x_it

    units = min(C // 128,
                max(1, block_vmem_budget // per_unit_all),
                max(1, target_x_block_bytes // per_unit_x))
    TN = max(128, units * 128)
    while C % TN != 0:               # keep tiles dividing C (C is a multiple of 128)
        TN -= 128
    return TN


def positional_encoding_forward(x: jnp.ndarray, pe: jnp.ndarray, *,
                                donate_x: bool = False) -> jnp.ndarray:
    """x: (B, S, D); pe: (max_len, D) or (1, max_len, D), f32 buffer.
    Returns x + pe[None, :S, :] with PyTorch type-promotion semantics.

    donate_x=True aliases x's buffer to the output (clobbers x) — only when the
    output dtype equals x.dtype."""
    if pe.ndim == 3:
        pe = pe[0]
    B, S, D = x.shape
    out_dtype = jnp.promote_types(x.dtype, pe.dtype)
    N = S * D

    vmem_limit, block_budget, target_block = _tpu_mem_plan()
    N_pad, K, C, TB = _plan_layout(B, N, x.dtype, out_dtype)
    TN = _choose_lane_tile(C, TB, K, x.dtype, out_dtype, pe.dtype,
                           block_budget, target_block)

    # Wrapper-side layout plumbing (cheap reshapes / one-time pad).
    pe_s = pe[:S, :] if pe.shape[0] != S else pe              # keep f32 (no pre-cast)
    x2 = x.reshape(B, N)
    pe2 = pe_s.reshape(1, N)
    if N_pad != N:
        x2 = jnp.pad(x2, ((0, 0), (0, N_pad - N)))
        pe2 = jnp.pad(pe2, ((0, 0), (0, N_pad - N)))
    x3 = x2.reshape(B, K, C)
    pe3 = pe2.reshape(K, C)

    aliases = {0: 0} if (donate_x and jnp.dtype(x.dtype) == jnp.dtype(out_dtype)) else {}

    x_it = jnp.dtype(x.dtype).itemsize
    o_it = jnp.dtype(out_dtype).itemsize

    out3 = pl.pallas_call(
        _pe_add_kernel,
        out_shape=jax.ShapeDtypeStruct((B, K, C), out_dtype),
        grid_spec=pltpu.PrefetchScalarGridSpec(
            num_scalar_prefetch=0,
            grid=(B // TB, C // TN),
            in_specs=[
                pl.BlockSpec((TB, K, TN), lambda b, n: (b, 0, n)),   # x tile
                pl.BlockSpec((K, TN), lambda b, n: (0, n)),          # pe tile (read once/lane tile)
            ],
            out_specs=pl.BlockSpec((TB, K, TN), lambda b, n: (b, 0, n)),
        ),
        compiler_params=pltpu.CompilerParams(
            # Independent blocks on both axes; on v7x megacore can shard these.
            dimension_semantics=("parallel", "parallel"),
            vmem_limit_bytes=vmem_limit,
        ),
        input_output_aliases=aliases,
        cost_estimate=pl.CostEstimate(
            flops=B * N_pad,
            transcendentals=0,
            bytes_accessed=B * N_pad * (x_it + o_it) + N_pad * jnp.dtype(pe.dtype).itemsize,
        ),
    )(x3, pe3)

    out2 = out3.reshape(B, N_pad)
    if N_pad != N:
        out2 = out2[:, :N]
    return out2.reshape(B, S, D)


if __name__ == "__main__":
    B, S, D = 2, 8, 32
    MAX_LEN = 64  # small max_len for the synthetic test (module default is 5000)

    key = jax.random.PRNGKey(0)
    x = jax.random.normal(key, (B, S, D), dtype=jnp.float32)

    pe = make_positional_encoding(D, MAX_LEN)

    # Reference (plain JAX) for correctness.
    ref = x + pe[None, :S, :]

    out = positional_encoding_forward(x, pe)
    out = jax.block_until_ready(out)

    assert out.shape == (B, S, D)
    assert out.dtype == ref.dtype
    assert jnp.allclose(out, ref, atol=1e-6, rtol=1e-6), "mismatch vs reference"

    print("KERNEL_OK")
</pallas_src>

<mosaic_0001>
module attributes {stable_mosaic.version = 11 : i64} {
  func.func @_pe_add_kernel(%arg0: i32, %arg1: i32, %arg2: memref<2x2x128xf32, #tpu.memory_space<vmem>>, %arg3: memref<2x128xf32, #tpu.memory_space<vmem>>, %arg4: memref<2x2x128xf32, #tpu.memory_space<vmem>>) attributes {dimension_semantics = [#tpu.dimension_semantics<parallel>, #tpu.dimension_semantics<parallel>], iteration_bounds = array<i64: 1, 1>, scalar_prefetch = 0 : i64, scratch_operands = 0 : i64, tpu.core_type = #tpu.core_type<tc>, window_params = [{transform_indices = @transform_0, window_bounds = array<i64: 2, 2, 128>}, {transform_indices = @transform_1, window_bounds = array<i64: 2, 128>}, {transform_indices = @transform_2, window_bounds = array<i64: 2, 2, 128>}]} {
    %c0 = arith.constant 0 : index
    %c0_0 = arith.constant 0 : index
    %c0_1 = arith.constant 0 : index
    %0 = vector.load %arg2[%c0, %c0_0, %c0_1] : memref<2x2x128xf32, #tpu.memory_space<vmem>>, vector<2x2x128xf32>
    %c0_2 = arith.constant 0 : index
    %c0_3 = arith.constant 0 : index
    %1 = vector.load %arg3[%c0_2, %c0_3] : memref<2x128xf32, #tpu.memory_space<vmem>>, vector<2x128xf32>
    %2 = vector.shape_cast %1 : vector<2x128xf32> to vector<1x2x128xf32>
    %3 = vector.broadcast %2 : vector<1x2x128xf32> to vector<2x2x128xf32>
    %4 = arith.addf %0, %3 : vector<2x2x128xf32>
    %c0_4 = arith.constant 0 : index
    %c0_5 = arith.constant 0 : index
    %c0_6 = arith.constant 0 : index
    %5 = vector.load %arg4[%c0_4, %c0_5, %c0_6] : memref<2x2x128xf32, #tpu.memory_space<vmem>>, vector<2x2x128xf32>
    tpu.vector_store %arg4[%c0_4, %c0_5, %c0_6], %4 {strides = array<i32>} : memref<2x2x128xf32, #tpu.memory_space<vmem>>, vector<2x2x128xf32>,
    return
  }
  func.func @transform_0(%arg0: i32, %arg1: i32) -> (i32, i32, i32) {
    %c0_i32 = arith.constant 0 : i32
    %c0_i32_0 = arith.constant 0 : i32
    return %arg0, %c0_i32, %arg1 : i32, i32, i32
  }
  func.func @transform_1(%arg0: i32, %arg1: i32) -> (i32, i32) {
    %c0_i32 = arith.constant 0 : i32
    %c0_i32_0 = arith.constant 0 : i32
    return %c0_i32, %arg1 : i32, i32
  }
  func.func @transform_2(%arg0: i32, %arg1: i32) -> (i32, i32, i32) {
    %c0_i32 = arith.constant 0 : i32
    %c0_i32_0 = arith.constant 0 : i32
    return %arg0, %c0_i32, %arg1 : i32, i32, i32
  }
}

</mosaic_0001>

<llo_original>
// kernel: tpu_custom_call.1
$region0: #{tpu_custom_call.1}
  #allocation0 [shape = 'u32[]', space=smem, size = 0x4, offset = 0x4, fixed_abs, tag = 'smem constant byte address 0x4 - core index']
  #allocation1 [shape = 'u32[72,128]{1,0:T(1,128)}', space=vmem, size = 0x9000, scoped, tag = 'internal scratch']
  %s0 = inlined_call_operand.hbm [shape: f32[2,2,128], index: 0, kind: input, shape index: {}]
  %s1 = inlined_call_operand.hbm [shape: f32[2,128], index: 1, kind: input, shape index: {}]
  %s2 = inlined_call_operand.hbm [shape: f32[2,2,128], index: 2, kind: output, shape index: {}]
  %s3 = sld [smem:[#allocation0]]
  $region26: #{tpu_custom_call.1} parent=0
    _
  %s5 = ssub.s32 1, %s3
  %s6 = scalar_select 0, %s5, %s3
  $region1: #{tpu_custom_call.1} parent=0
    #allocation2 [shape = 'u8[2048]{0}', space=vmem, size = 0x800, scoped, tag = 'input window, operand 0, single buffered']
    #allocation3 [shape = 's32[1]{0}', space=sflag, size = 0x4, scoped, tag = 'scoped memory for tpu_custom_call.1']
    #allocation4 [shape = 's32[1]{0}', space=sflag, size = 0x4, scoped, tag = 'scoped memory for tpu_custom_call.1']
    #allocation5 [shape = 'u8[1024]{0}', space=vmem, size = 0x400, scoped, tag = 'input window, operand 1, single buffered']
    #allocation6 [shape = 's32[1]{0}', space=sflag, size = 0x4, scoped, tag = 'scoped memory for tpu_custom_call.1']
    #allocation7 [shape = 'u8[2048]{0}', space=vmem, size = 0x800, scoped, tag = 'output window, operand 0, single buffered']
    %7 = vsyncpa [#allocation3], 0
    %8 = vsyncpa [#allocation6], 0
    %9 = vsyncpa [#allocation4], 0
    // Predicated region
    $region2: #{tpu_custom_call.1} parent=1 // pred_check
      _
    $region3: #{tpu_custom_call.1} parent=1 // pred_check_branch
      %11 = sbr.rel (0) target = $region5
    $region4: #{tpu_custom_call.1} parent=1 // pred_region
      %13 = vsyncadd [#allocation3], 0
      %s14 = sshll.u32 %s0, 4
      %s15 = int_to_ptr.hbm [resolvable:$true] %s14
      %s16 = sshll.u32 [#allocation2], 4
      %s17 = int_to_ptr.vmem [resolvable:$true] %s16
      %22 = dma.hbm_to_vmem [thread:$0]  %s15, 64, %s17, [#allocation3], 32, 32, 2
    $region5: #{tpu_custom_call.1} parent=1 // pred_fallthru
      _
    // Predicated region
    $region6: #{tpu_custom_call.1} parent=1 // pred_check
      _
    $region7: #{tpu_custom_call.1} parent=1 // pred_check_branch
      %24 = sbr.rel (0) target = $region9
    $region8: #{tpu_custom_call.1} parent=1 // pred_region
      %26 = vsyncadd [#allocation6], 0
      %s28 = sshll.u32 %s1, 4
      %s29 = int_to_ptr.hbm [resolvable:$true] %s28
      %s30 = sshll.u32 [#allocation5], 4
      %s31 = int_to_ptr.vmem [resolvable:$true] %s30
      %33 = dma.hbm_to_vmem [thread:$0]  %s29, 32, %s31, [#allocation6]
    $region9: #{tpu_custom_call.1} parent=1 // pred_fallthru
      _
    // Predicated region
    $region10: #{tpu_custom_call.1} parent=1 // pred_check
      _
    $region11: #{tpu_custom_call.1} parent=1 // pred_check_branch
      %35 = sbr.rel (0) target = $region13
    $region12: #{tpu_custom_call.1} parent=1 // pred_region
      %37 = dma.done [#allocation3], 64
    $region13: #{tpu_custom_call.1} parent=1 // pred_fallthru
      _
    // Predicated region
    $region14: #{tpu_custom_call.1} parent=1 // pred_check
      _
    $region15: #{tpu_custom_call.1} parent=1 // pred_check_branch
      %39 = sbr.rel (0) target = $region17
    $region16: #{tpu_custom_call.1} parent=1 // pred_region
      %41 = dma.done [#allocation6], 32
    $region17: #{tpu_custom_call.1} parent=1 // pred_fallthru
      _
    %v42 = vld [vmem:[#allocation2] sm:$0x3]
    %v43 = vld [vmem:[#allocation2 + $0x2] sm:$0x3]
    %v44 = vld [vmem:[#allocation5] sm:$0x3]
    %v45 = vadd.f32 %v42, %v44
    %v46 = vadd.f32 %v43, %v44
    %47 = vst [vmem:[#allocation7] sm:$0x3] %v45
    %48 = vst [vmem:[#allocation7 + $0x2] sm:$0x3] %v46
    // Predicated region
    $region18: #{tpu_custom_call.1} parent=1 // pred_check
      _
    $region19: #{tpu_custom_call.1} parent=1 // pred_check_branch
      %50 = sbr.rel (0) target = $region21
    $region20: #{tpu_custom_call.1} parent=1 // pred_region
      %52 = vsyncadd [#allocation4], 0
      %s53 = sshll.u32 [#allocation7], 4
      %s54 = int_to_ptr.vmem [resolvable:$true] %s53
      %s55 = sshll.u32 %s2, 4
      %s56 = int_to_ptr.hbm [resolvable:$true] %s55
      %61 = dma.vmem_to_hbm [thread:$0]  %s54, 64, %s56, [#allocation4], 32, 32, 2
    $region21: #{tpu_custom_call.1} parent=1 // pred_fallthru
      _
    // Predicated region
    $region22: #{tpu_custom_call.1} parent=1 // pred_check
      _
    $region23: #{tpu_custom_call.1} parent=1 // pred_check_branch
      %63 = sbr.rel (0) target = $region25
    $region24: #{tpu_custom_call.1} parent=1 // pred_region
      %65 = dma.done [#allocation4], 64
    $region25: #{tpu_custom_call.1} parent=1 // pred_fallthru
      _
    %66 = vsyncpa [#allocation3], 1
    %67 = vsyncpa [#allocation6], 1
    %68 = vsyncpa [#allocation4], 1

</llo_original>
